<compile_context>
chip_gen: v6e
topology: v6e:2x2x1
jax: 0.10.0
libtpu: 0.0.40
codegen_flags: <defaults>
</compile_context>

<pallas_src>
import math
import jax
import jax.numpy as jnp
from jax.experimental import pallas as pl

# ----- small model configuration (mini-BERT) -----
B = 2          # number of bbox prompts in a "batch"
S = 8          # tokenized sequence length
BS = B * S
H = 32         # hidden size
NH = 2         # attention heads
HD = H // NH   # head dim
F = 64         # FFN intermediate size
VOCAB = 128    # toy vocabulary
LN_EPS = 1e-12
LANES = 128

# ----- bf16 weight-slab row offsets (all multiples of 16 = bf16 sublane tile) -----
_R_TOK = 0       # (VOCAB, H)  token embedding table
_R_SEGB = 128    # (BS, B)     batch broadcast selector   (row r -> batch r//S)
_R_SEGBT = 144   # (B, BS)     batch segment-sum selector (transpose of SEGB)
_R_WQ = 160      # (H, H)      Wq (pre-scaled by 1/sqrt(HD))
_R_WK = 192      # (H, H)
_R_WV = 224      # (H, H)
_R_SELH = 256    # (H, 128)    lane -> head one-hot
_R_SELHT = 288   # (128, H)    head -> lane one-hot (transpose)
_R_WO = 416      # (H, H)
_R_W1 = 448      # (H, F)
_R_W2 = 480      # (F, H)
_RW = 544

# ----- f32 vector-slab row offsets (multiples of 8 = f32 sublane tile) -----
_V_POS = 0       # (BS, H) position embeddings, pre-tiled over the batch
_V_MASK = 16     # (BS, 1) additive attention-mask bias (0 / -1e9)
_V_EMB_G = 32
_V_EMB_B = 40
_V_BQ = 48       # pre-scaled by 1/sqrt(HD)
_V_BK = 56
_V_BV = 64
_V_BO = 72
_V_LN1G = 80
_V_LN1B = 88
_V_B1 = 96       # (1, F)
_V_B2 = 104
_V_LN2G = 112
_V_LN2B = 120
_RV = 128


def _layer_norm(t, g, b):
    mu = jnp.mean(t, axis=-1, keepdims=True)
    var = jnp.mean((t - mu) ** 2, axis=-1, keepdims=True)
    return (t - mu) * jax.lax.rsqrt(var + LN_EPS) * g + b


def _text_encoder_cls_kernel(ids_ref, vec_ref, w_ref, cls_ref):
    """Full fused mini-BERT forward; writes only the [CLS] row per prompt (B,H)."""
    f32, bf16 = jnp.float32, jnp.bfloat16

    def vrow(r, n=H):                      # (1, n) f32 parameter vector
        return vec_ref[r:r + 1, 0:n]

    def wblk(r, rows, cols):               # (rows, cols) bf16 weight block
        return w_ref[r:r + rows, 0:cols]

    def mm(a, b):                          # bf16 MXU matmul, f32 accumulation
        return jnp.dot(a.astype(bf16), b.astype(bf16),
                       preferred_element_type=f32)

    # ---- embedding: one-hot token gather on the (idle) MXU + pos-emb + LN ----
    # TODO(synk): replace with a scalar-prefetch row gather before scaling VOCAB.
    ids = ids_ref[...]                                                  # (BS, 1) int32
    onehot = (jax.lax.broadcasted_iota(jnp.int32, (BS, VOCAB), 1) == ids).astype(bf16)
    x = mm(onehot, wblk(_R_TOK, VOCAB, H))                              # (BS, H) f32
    x = x + vec_ref[_V_POS:_V_POS + BS, 0:H]                            # + position emb
    x = _layer_norm(x, vrow(_V_EMB_G), vrow(_V_EMB_B))                  # (BS, H) f32
    xb = x.astype(bf16)

    # CLS rows (one per prompt), kept f32 for the residual path.
    x_cls = jnp.concatenate([x[0:1, :], x[S:S + 1, :]], axis=0)         # (B, H)

    # ---- flat 2-D projections (bf16 operands, f32 accumulate) ----
    q_cls = mm(x_cls, wblk(_R_WQ, H, H)) + vrow(_V_BQ)                  # (B, H)
    k = mm(xb, wblk(_R_WK, H, H)) + vrow(_V_BK)                         # (BS, H)
    v = mm(xb, wblk(_R_WV, H, H)) + vrow(_V_BV)                         # (BS, H)

    # ---- CLS multi-head attention: no per-head / per-batch lane slicing.
    # Head split = lane->head selector matmul; batch segment sums / broadcasts
    # = 0/1 selector matmuls.  Softmax itself stays f32 with exact division.
    q_bc = mm(wblk(_R_SEGB, BS, B), q_cls)                              # (BS, H) own CLS query per row
    scores = mm(q_bc * k, wblk(_R_SELH, H, LANES))                      # (BS, 128): lanes 0:NH = per-head scores
    scores = scores + vec_ref[_V_MASK:_V_MASK + BS, 0:1]                # additive padding mask
    # Column-global max is constant within each prompt's rows -> softmax unchanged, stable.
    p_un = jnp.exp(scores - jnp.max(scores, axis=0, keepdims=True))     # (BS, 128)
    den = mm(wblk(_R_SEGBT, B, BS), p_un)                               # (B, 128) per-(prompt, head) sum
    den_bc = mm(wblk(_R_SEGB, BS, B), den)                              # (BS, 128)
    p = p_un / den_bc                                                   # exact division
    p_lane = mm(p, wblk(_R_SELHT, LANES, H))                            # (BS, H): prob of each lane's own head
    ctx = mm(wblk(_R_SEGBT, B, BS), p_lane * v)                         # (B, H): per-prompt CLS context
    attn = mm(ctx, wblk(_R_WO, H, H)) + vrow(_V_BO)                     # (B, H)

    # ---- residual + LN1, FFN, residual + LN2 (CLS rows only) ----
    h1 = _layer_norm(x_cls + attn, vrow(_V_LN1G), vrow(_V_LN1B))        # (B, H)
    ff = mm(h1, wblk(_R_W1, H, F)) + vrow(_V_B1, F)                     # (B, F)
    # TODO(synk): HF BERT uses exact erf-GELU; tanh approximation kept (EUP-friendly).
    ff = jax.nn.gelu(ff, approximate=True)
    ff = mm(ff, wblk(_R_W2, F, H)) + vrow(_V_B2)                        # (B, H)
    out = _layer_norm(h1 + ff, vrow(_V_LN2G), vrow(_V_LN2B))            # (B, H)

    cls_ref[...] = out.astype(cls_ref.dtype)


def init_params(key):
    """Deterministic synthetic parameters (shapes follow a mini BERT layer)."""
    ks = jax.random.split(key, 8)
    std = 0.02
    p = {}
    p["tok_emb"] = jax.random.normal(ks[0], (VOCAB, H), jnp.float32) * std
    p["pos_emb"] = jax.random.normal(ks[1], (S, H), jnp.float32) * std
    p["emb_ln_g"] = jnp.ones((H,), jnp.float32)
    p["emb_ln_b"] = jnp.zeros((H,), jnp.float32)
    p["wq"] = jax.random.normal(ks[2], (H, H), jnp.float32) * std
    p["bq"] = jnp.zeros((H,), jnp.float32)
    p["wk"] = jax.random.normal(ks[3], (H, H), jnp.float32) * std
    p["bk"] = jnp.zeros((H,), jnp.float32)
    p["wv"] = jax.random.normal(ks[4], (H, H), jnp.float32) * std
    p["bv"] = jnp.zeros((H,), jnp.float32)
    p["wo"] = jax.random.normal(ks[5], (H, H), jnp.float32) * std
    p["bo"] = jnp.zeros((H,), jnp.float32)
    p["ln1_g"] = jnp.ones((H,), jnp.float32)
    p["ln1_b"] = jnp.zeros((H,), jnp.float32)
    p["w1"] = jax.random.normal(ks[6], (H, F), jnp.float32) * std
    p["b1"] = jnp.zeros((F,), jnp.float32)
    p["w2"] = jax.random.normal(ks[7], (F, H), jnp.float32) * std
    p["b2"] = jnp.zeros((H,), jnp.float32)
    p["ln2_g"] = jnp.ones((H,), jnp.float32)
    p["ln2_b"] = jnp.zeros((H,), jnp.float32)
    return p


def _pack_weight_slab(p):
    """All MXU operands in one lane-dense bf16 (_RW, 128) slab -> a single DMA."""
    scale = 1.0 / math.sqrt(HD)
    # Constant 0/1 selector matrices (exact in bf16).
    segb = (jnp.arange(B)[None, :] == (jnp.arange(BS) // S)[:, None]).astype(jnp.float32)
    selh = (jnp.arange(LANES)[None, :] == (jnp.arange(H) // HD)[:, None]).astype(jnp.float32)

    w = jnp.zeros((_RW, LANES), jnp.float32)
    w = w.at[_R_TOK:_R_TOK + VOCAB, :H].set(p["tok_emb"])
    w = w.at[_R_SEGB:_R_SEGB + BS, :B].set(segb)
    w = w.at[_R_SEGBT:_R_SEGBT + B, :BS].set(segb.T)
    w = w.at[_R_WQ:_R_WQ + H, :H].set(p["wq"] * scale)   # attention scale folded in
    w = w.at[_R_WK:_R_WK + H, :H].set(p["wk"])
    w = w.at[_R_WV:_R_WV + H, :H].set(p["wv"])
    w = w.at[_R_SELH:_R_SELH + H, :LANES].set(selh)
    w = w.at[_R_SELHT:_R_SELHT + LANES, :H].set(selh.T)
    w = w.at[_R_WO:_R_WO + H, :H].set(p["wo"])
    w = w.at[_R_W1:_R_W1 + H, :F].set(p["w1"])
    w = w.at[_R_W2:_R_W2 + F, :H].set(p["w2"])
    return w.astype(jnp.bfloat16)


def _pack_vec_slab(p, attn_mask):
    """All elementwise vectors (biases, LN params, pos-emb, mask bias) in one f32 slab."""
    scale = 1.0 / math.sqrt(HD)
    v = jnp.zeros((_RV, LANES), jnp.float32)
    v = v.at[_V_POS:_V_POS + BS, :H].set(jnp.tile(p["pos_emb"], (B, 1)))
    v = v.at[_V_MASK:_V_MASK + BS, 0].set(((attn_mask - 1.0) * 1e9).reshape(-1))
    v = v.at[_V_EMB_G, :H].set(p["emb_ln_g"])
    v = v.at[_V_EMB_B, :H].set(p["emb_ln_b"])
    v = v.at[_V_BQ, :H].set(p["bq"] * scale)
    v = v.at[_V_BK, :H].set(p["bk"])
    v = v.at[_V_BV, :H].set(p["bv"])
    v = v.at[_V_BO, :H].set(p["bo"])
    v = v.at[_V_LN1G, :H].set(p["ln1_g"])
    v = v.at[_V_LN1B, :H].set(p["ln1_b"])
    v = v.at[_V_B1, :F].set(p["b1"])
    v = v.at[_V_B2, :H].set(p["b2"])
    v = v.at[_V_LN2G, :H].set(p["ln2_g"])
    v = v.at[_V_LN2B, :H].set(p["ln2_b"])
    return v


@jax.jit
def text_feature_extractor_forward(token_ids, attn_mask, params):
    """Equivalent of: outputs = textModel(**encoded_input);
    cls = outputs.last_hidden_state[:, 0, :]  -> (B, H)."""
    w_slab = _pack_weight_slab(params)
    vec_slab = _pack_vec_slab(params, attn_mask.astype(jnp.float32))
    ids = token_ids.astype(jnp.int32).reshape(BS, 1)

    # Single kernel invocation, no grid: 3 input DMAs total (ids + two packed
    # slabs), one (B, H) output store, zero per-step pipeline overhead.
    # TODO(synk): for larger B, add grid=(B//tb,) + dimension_semantics=("parallel",)
    # so v7x can split prompts across its two TensorCores.
    return pl.pallas_call(
        _text_encoder_cls_kernel,
        out_shape=jax.ShapeDtypeStruct((B, H), jnp.float32),
    )(ids, vec_slab, w_slab)


if __name__ == "__main__":
    root = jax.random.PRNGKey(0)
    k_params, k_tok = jax.random.split(root)
    params = init_params(k_params)

    # Synthetic "tokenized bbox prompt" ids, e.g. tokenizer("x1 y1 x2 y2 cls").
    token_ids = jax.random.randint(k_tok, (B, S), 0, VOCAB)
    # Token 0 plays the role of [CLS] at position 0, as in BERT tokenization.
    token_ids = token_ids.at[:, 0].set(0)
    # Tokenizer attention_mask: second prompt padded to length 6.
    attn_mask = jnp.ones((B, S), jnp.float32).at[1, 6:].set(0.0)

    cls_emb = text_feature_extractor_forward(token_ids, attn_mask, params)
    cls_emb = jax.block_until_ready(cls_emb)
    assert cls_emb.shape == (B, H) and cls_emb.dtype == jnp.float32
    assert bool(jnp.all(jnp.isfinite(cls_emb)))
    print("KERNEL_OK")
</pallas_src>

<mosaic_0001>
module attributes {stable_mosaic.version = 11 : i64} {
  func.func @_text_encoder_cls_kernel(%arg0: memref<16x1xi32, #tpu.memory_space<vmem>>, %arg1: memref<128x128xf32, #tpu.memory_space<vmem>>, %arg2: memref<544x128xbf16, #tpu.memory_space<vmem>>, %arg3: memref<2x32xf32, #tpu.memory_space<vmem>>) attributes {dimension_semantics = [], scalar_prefetch = 0 : i64, scratch_operands = 0 : i64, tpu.core_type = #tpu.core_type<tc>} {
    %c0 = arith.constant 0 : index
    %c0_0 = arith.constant 0 : index
    %0 = vector.load %arg0[%c0, %c0_0] : memref<16x1xi32, #tpu.memory_space<vmem>>, vector<16x1xi32>
    %1 = tpu.iota {dimensions = array<i32: 1>} : vector<16x128xi32>
    %2 = vector.broadcast %0 : vector<16x1xi32> to vector<16x128xi32>
    %3 = arith.cmpi eq, %1, %2 : vector<16x128xi32>
    %4 = arith.extui %3 : vector<16x128xi1> to vector<16x128xi32>
    %5 = arith.sitofp %4 : vector<16x128xi32> to vector<16x128xf32>
    %6 = arith.truncf %5 : vector<16x128xf32> to vector<16x128xbf16>
    %c0_1 = arith.constant 0 : index
    %c0_2 = arith.constant 0 : index
    %7 = vector.load %arg2[%c0_1, %c0_2] : memref<544x128xbf16, #tpu.memory_space<vmem>>, vector<128x32xbf16>
    %cst = arith.constant dense<0.000000e+00> : vector<16x32xf32>
    %8 = tpu.matmul %6, %7, %cst {dimension_numbers = #tpu.dot_dimension_numbers<[1], [0], [0], [1], [0, 0, 1, 1], [], []>} : vector<16x128xbf16>, vector<128x32xbf16>, vector<16x32xf32> -> vector<16x32xf32>
    %c0_3 = arith.constant 0 : index
    %c0_4 = arith.constant 0 : index
    %9 = vector.load %arg1[%c0_3, %c0_4] : memref<128x128xf32, #tpu.memory_space<vmem>>, vector<16x32xf32>
    %10 = arith.addf %8, %9 : vector<16x32xf32>
    %c32 = arith.constant 32 : index
    %c0_5 = arith.constant 0 : index
    %11 = vector.load %arg1[%c32, %c0_5] : memref<128x128xf32, #tpu.memory_space<vmem>>, vector<1x32xf32>
    %c40 = arith.constant 40 : index
    %c0_6 = arith.constant 0 : index
    %12 = vector.load %arg1[%c40, %c0_6] : memref<128x128xf32, #tpu.memory_space<vmem>>, vector<1x32xf32>
    %cst_7 = arith.constant dense<0.000000e+00> : vector<16xf32>
    %13 = vector.multi_reduction <add>, %10, %cst_7 [1] : vector<16x32xf32> to vector<16xf32>
    %14 = vector.shape_cast %13 : vector<16xf32> to vector<16x1xf32>
    %cst_8 = arith.constant 3.200000e+01 : f32
    %15 = vector.broadcast %cst_8 : f32 to vector<16x1xf32>
    %16 = arith.divf %14, %15 : vector<16x1xf32>
    %17 = vector.broadcast %16 : vector<16x1xf32> to vector<16x32xf32>
    %18 = arith.subf %10, %17 : vector<16x32xf32>
    %19 = arith.mulf %18, %18 : vector<16x32xf32>
    %cst_9 = arith.constant dense<0.000000e+00> : vector<16xf32>
    %20 = vector.multi_reduction <add>, %19, %cst_9 [1] : vector<16x32xf32> to vector<16xf32>
    %21 = vector.shape_cast %20 : vector<16xf32> to vector<16x1xf32>
    %cst_10 = arith.constant 3.200000e+01 : f32
    %22 = vector.broadcast %cst_10 : f32 to vector<16x1xf32>
    %23 = arith.divf %21, %22 : vector<16x1xf32>
    %24 = vector.broadcast %16 : vector<16x1xf32> to vector<16x32xf32>
    %25 = arith.subf %10, %24 : vector<16x32xf32>
    %cst_11 = arith.constant 9.99999996E-13 : f32
    %26 = vector.broadcast %cst_11 : f32 to vector<16x1xf32>
    %27 = arith.addf %23, %26 : vector<16x1xf32>
    %28 = math.rsqrt %27 : vector<16x1xf32>
    %29 = vector.broadcast %28 : vector<16x1xf32> to vector<16x32xf32>
    %30 = arith.mulf %25, %29 : vector<16x32xf32>
    %31 = vector.broadcast %11 : vector<1x32xf32> to vector<16x32xf32>
    %32 = arith.mulf %30, %31 : vector<16x32xf32>
    %33 = vector.broadcast %12 : vector<1x32xf32> to vector<16x32xf32>
    %34 = arith.addf %32, %33 : vector<16x32xf32>
    %35 = arith.truncf %34 : vector<16x32xf32> to vector<16x32xbf16>
    %36 = vector.extract_strided_slice %34 {offsets = [0, 0], sizes = [1, 32], strides = [1, 1]} : vector<16x32xf32> to vector<1x32xf32>
    %37 = vector.extract_strided_slice %34 {offsets = [8, 0], sizes = [1, 32], strides = [1, 1]} : vector<16x32xf32> to vector<1x32xf32>
    %38 = tpu.concatenate %36, %37 in 0 : vector<1x32xf32>, vector<1x32xf32> -> vector<2x32xf32>
    %c160 = arith.constant 160 : index
    %c0_12 = arith.constant 0 : index
    %39 = vector.load %arg2[%c160, %c0_12] : memref<544x128xbf16, #tpu.memory_space<vmem>>, vector<32x32xbf16>
    %40 = arith.truncf %38 : vector<2x32xf32> to vector<2x32xbf16>
    %cst_13 = arith.constant dense<0.000000e+00> : vector<2x32xf32>
    %41 = tpu.matmul %40, %39, %cst_13 {dimension_numbers = #tpu.dot_dimension_numbers<[1], [0], [0], [1], [0, 0, 1, 1], [], []>} : vector<2x32xbf16>, vector<32x32xbf16>, vector<2x32xf32> -> vector<2x32xf32>
    %c48 = arith.constant 48 : index
    %c0_14 = arith.constant 0 : index
    %42 = vector.load %arg1[%c48, %c0_14] : memref<128x128xf32, #tpu.memory_space<vmem>>, vector<1x32xf32>
    %43 = vector.broadcast %42 : vector<1x32xf32> to vector<2x32xf32>
    %44 = arith.addf %41, %43 : vector<2x32xf32>
    %c192 = arith.constant 192 : index
    %c0_15 = arith.constant 0 : index
    %45 = vector.load %arg2[%c192, %c0_15] : memref<544x128xbf16, #tpu.memory_space<vmem>>, vector<32x32xbf16>
    %cst_16 = arith.constant dense<0.000000e+00> : vector<16x32xf32>
    %46 = tpu.matmul %35, %45, %cst_16 {dimension_numbers = #tpu.dot_dimension_numbers<[1], [0], [0], [1], [0, 0, 1, 1], [], []>} : vector<16x32xbf16>, vector<32x32xbf16>, vector<16x32xf32> -> vector<16x32xf32>
    %c56 = arith.constant 56 : index
    %c0_17 = arith.constant 0 : index
    %47 = vector.load %arg1[%c56, %c0_17] : memref<128x128xf32, #tpu.memory_space<vmem>>, vector<1x32xf32>
    %48 = vector.broadcast %47 : vector<1x32xf32> to vector<16x32xf32>
    %49 = arith.addf %46, %48 : vector<16x32xf32>
    %c224 = arith.constant 224 : index
    %c0_18 = arith.constant 0 : index
    %50 = vector.load %arg2[%c224, %c0_18] : memref<544x128xbf16, #tpu.memory_space<vmem>>, vector<32x32xbf16>
    %cst_19 = arith.constant dense<0.000000e+00> : vector<16x32xf32>
    %51 = tpu.matmul %35, %50, %cst_19 {dimension_numbers = #tpu.dot_dimension_numbers<[1], [0], [0], [1], [0, 0, 1, 1], [], []>} : vector<16x32xbf16>, vector<32x32xbf16>, vector<16x32xf32> -> vector<16x32xf32>
    %c64 = arith.constant 64 : index
    %c0_20 = arith.constant 0 : index
    %52 = vector.load %arg1[%c64, %c0_20] : memref<128x128xf32, #tpu.memory_space<vmem>>, vector<1x32xf32>
    %53 = vector.broadcast %52 : vector<1x32xf32> to vector<16x32xf32>
    %54 = arith.addf %51, %53 : vector<16x32xf32>
    %c128 = arith.constant 128 : index
    %c0_21 = arith.constant 0 : index
    %55 = vector.load %arg2[%c128, %c0_21] : memref<544x128xbf16, #tpu.memory_space<vmem>>, vector<16x2xbf16>
    %56 = arith.truncf %44 : vector<2x32xf32> to vector<2x32xbf16>
    %cst_22 = arith.constant dense<0.000000e+00> : vector<16x32xf32>
    %57 = tpu.matmul %55, %56, %cst_22 {dimension_numbers = #tpu.dot_dimension_numbers<[1], [0], [0], [1], [0, 0, 1, 1], [], []>} : vector<16x2xbf16>, vector<2x32xbf16>, vector<16x32xf32> -> vector<16x32xf32>
    %58 = arith.mulf %57, %49 : vector<16x32xf32>
    %c256 = arith.constant 256 : index
    %c0_23 = arith.constant 0 : index
    %59 = vector.load %arg2[%c256, %c0_23] : memref<544x128xbf16, #tpu.memory_space<vmem>>, vector<32x128xbf16>
    %60 = arith.truncf %58 : vector<16x32xf32> to vector<16x32xbf16>
    %cst_24 = arith.constant dense<0.000000e+00> : vector<16x128xf32>
    %61 = tpu.matmul %60, %59, %cst_24 {dimension_numbers = #tpu.dot_dimension_numbers<[1], [0], [0], [1], [0, 0, 1, 1], [], []>} : vector<16x32xbf16>, vector<32x128xbf16>, vector<16x128xf32> -> vector<16x128xf32>
    %c16 = arith.constant 16 : index
    %c0_25 = arith.constant 0 : index
    %62 = vector.load %arg1[%c16, %c0_25] : memref<128x128xf32, #tpu.memory_space<vmem>>, vector<16x1xf32>
    %63 = vector.broadcast %62 : vector<16x1xf32> to vector<16x128xf32>
    %64 = arith.addf %61, %63 : vector<16x128xf32>
    %cst_26 = arith.constant dense<0xFF800000> : vector<128xf32>
    %65 = vector.multi_reduction <maximumf>, %64, %cst_26 [0] : vector<16x128xf32> to vector<128xf32>
    %66 = vector.shape_cast %65 : vector<128xf32> to vector<1x128xf32>
    %67 = vector.broadcast %66 : vector<1x128xf32> to vector<16x128xf32>
    %68 = arith.subf %64, %67 : vector<16x128xf32>
    %69 = math.exp %68 : vector<16x128xf32>
    %c144 = arith.constant 144 : index
    %c0_27 = arith.constant 0 : index
    %70 = vector.load %arg2[%c144, %c0_27] : memref<544x128xbf16, #tpu.memory_space<vmem>>, vector<2x16xbf16>
    %71 = arith.truncf %69 : vector<16x128xf32> to vector<16x128xbf16>
    %cst_28 = arith.constant dense<0.000000e+00> : vector<2x128xf32>
    %72 = tpu.matmul %70, %71, %cst_28 {dimension_numbers = #tpu.dot_dimension_numbers<[1], [0], [0], [1], [0, 0, 1, 1], [], []>} : vector<2x16xbf16>, vector<16x128xbf16>, vector<2x128xf32> -> vector<2x128xf32>
    %c128_29 = arith.constant 128 : index
    %c0_30 = arith.constant 0 : index
    %73 = vector.load %arg2[%c128_29, %c0_30] : memref<544x128xbf16, #tpu.memory_space<vmem>>, vector<16x2xbf16>
    %74 = arith.truncf %72 : vector<2x128xf32> to vector<2x128xbf16>
    %cst_31 = arith.constant dense<0.000000e+00> : vector<16x128xf32>
    %75 = tpu.matmul %73, %74, %cst_31 {dimension_numbers = #tpu.dot_dimension_numbers<[1], [0], [0], [1], [0, 0, 1, 1], [], []>} : vector<16x2xbf16>, vector<2x128xbf16>, vector<16x128xf32> -> vector<16x128xf32>
    %76 = arith.divf %69, %75 : vector<16x128xf32>
    %c288 = arith.constant 288 : index
    %c0_32 = arith.constant 0 : index
    %77 = vector.load %arg2[%c288, %c0_32] : memref<544x128xbf16, #tpu.memory_space<vmem>>, vector<128x32xbf16>
    %78 = arith.truncf %76 : vector<16x128xf32> to vector<16x128xbf16>
    %cst_33 = arith.constant dense<0.000000e+00> : vector<16x32xf32>
    %79 = tpu.matmul %78, %77, %cst_33 {dimension_numbers = #tpu.dot_dimension_numbers<[1], [0], [0], [1], [0, 0, 1, 1], [], []>} : vector<16x128xbf16>, vector<128x32xbf16>, vector<16x32xf32> -> vector<16x32xf32>
    %c144_34 = arith.constant 144 : index
    %c0_35 = arith.constant 0 : index
    %80 = vector.load %arg2[%c144_34, %c0_35] : memref<544x128xbf16, #tpu.memory_space<vmem>>, vector<2x16xbf16>
    %81 = arith.mulf %79, %54 : vector<16x32xf32>
    %82 = arith.truncf %81 : vector<16x32xf32> to vector<16x32xbf16>
    %cst_36 = arith.constant dense<0.000000e+00> : vector<2x32xf32>
    %83 = tpu.matmul %80, %82, %cst_36 {dimension_numbers = #tpu.dot_dimension_numbers<[1], [0], [0], [1], [0, 0, 1, 1], [], []>} : vector<2x16xbf16>, vector<16x32xbf16>, vector<2x32xf32> -> vector<2x32xf32>
    %c416 = arith.constant 416 : index
    %c0_37 = arith.constant 0 : index
    %84 = vector.load %arg2[%c416, %c0_37] : memref<544x128xbf16, #tpu.memory_space<vmem>>, vector<32x32xbf16>
    %85 = arith.truncf %83 : vector<2x32xf32> to vector<2x32xbf16>
    %cst_38 = arith.constant dense<0.000000e+00> : vector<2x32xf32>
    %86 = tpu.matmul %85, %84, %cst_38 {dimension_numbers = #tpu.dot_dimension_numbers<[1], [0], [0], [1], [0, 0, 1, 1], [], []>} : vector<2x32xbf16>, vector<32x32xbf16>, vector<2x32xf32> -> vector<2x32xf32>
    %c72 = arith.constant 72 : index
    %c0_39 = arith.constant 0 : index
    %87 = vector.load %arg1[%c72, %c0_39] : memref<128x128xf32, #tpu.memory_space<vmem>>, vector<1x32xf32>
    %88 = vector.broadcast %87 : vector<1x32xf32> to vector<2x32xf32>
    %89 = arith.addf %86, %88 : vector<2x32xf32>
    %90 = arith.addf %38, %89 : vector<2x32xf32>
    %c80 = arith.constant 80 : index
    %c0_40 = arith.constant 0 : index
    %91 = vector.load %arg1[%c80, %c0_40] : memref<128x128xf32, #tpu.memory_space<vmem>>, vector<1x32xf32>
    %c88 = arith.constant 88 : index
    %c0_41 = arith.constant 0 : index
    %92 = vector.load %arg1[%c88, %c0_41] : memref<128x128xf32, #tpu.memory_space<vmem>>, vector<1x32xf32>
    %cst_42 = arith.constant dense<0.000000e+00> : vector<2xf32>
    %93 = vector.multi_reduction <add>, %90, %cst_42 [1] : vector<2x32xf32> to vector<2xf32>
    %94 = vector.shape_cast %93 : vector<2xf32> to vector<2x1xf32>
    %cst_43 = arith.constant 3.200000e+01 : f32
    %95 = vector.broadcast %cst_43 : f32 to vector<2x1xf32>
    %96 = arith.divf %94, %95 : vector<2x1xf32>
    %97 = vector.broadcast %96 : vector<2x1xf32> to vector<2x32xf32>
    %98 = arith.subf %90, %97 : vector<2x32xf32>
    %99 = arith.mulf %98, %98 : vector<2x32xf32>
    %cst_44 = arith.constant dense<0.000000e+00> : vector<2xf32>
    %100 = vector.multi_reduction <add>, %99, %cst_44 [1] : vector<2x32xf32> to vector<2xf32>
    %101 = vector.shape_cast %100 : vector<2xf32> to vector<2x1xf32>
    %cst_45 = arith.constant 3.200000e+01 : f32
    %102 = vector.broadcast %cst_45 : f32 to vector<2x1xf32>
    %103 = arith.divf %101, %102 : vector<2x1xf32>
    %104 = vector.broadcast %96 : vector<2x1xf32> to vector<2x32xf32>
    %105 = arith.subf %90, %104 : vector<2x32xf32>
    %cst_46 = arith.constant 9.99999996E-13 : f32
    %106 = vector.broadcast %cst_46 : f32 to vector<2x1xf32>
    %107 = arith.addf %103, %106 : vector<2x1xf32>
    %108 = math.rsqrt %107 : vector<2x1xf32>
    %109 = vector.broadcast %108 : vector<2x1xf32> to vector<2x32xf32>
    %110 = arith.mulf %105, %109 : vector<2x32xf32>
    %111 = vector.broadcast %91 : vector<1x32xf32> to vector<2x32xf32>
    %112 = arith.mulf %110, %111 : vector<2x32xf32>
    %113 = vector.broadcast %92 : vector<1x32xf32> to vector<2x32xf32>
    %114 = arith.addf %112, %113 : vector<2x32xf32>
    %c448 = arith.constant 448 : index
    %c0_47 = arith.constant 0 : index
    %115 = vector.load %arg2[%c448, %c0_47] : memref<544x128xbf16, #tpu.memory_space<vmem>>, vector<32x64xbf16>
    %116 = arith.truncf %114 : vector<2x32xf32> to vector<2x32xbf16>
    %cst_48 = arith.constant dense<0.000000e+00> : vector<2x64xf32>
    %117 = tpu.matmul %116, %115, %cst_48 {dimension_numbers = #tpu.dot_dimension_numbers<[1], [0], [0], [1], [0, 0, 1, 1], [], []>} : vector<2x32xbf16>, vector<32x64xbf16>, vector<2x64xf32> -> vector<2x64xf32>
    %c96 = arith.constant 96 : index
    %c0_49 = arith.constant 0 : index
    %118 = vector.load %arg1[%c96, %c0_49] : memref<128x128xf32, #tpu.memory_space<vmem>>, vector<1x64xf32>
    %119 = vector.broadcast %118 : vector<1x64xf32> to vector<2x64xf32>
    %120 = arith.addf %117, %119 : vector<2x64xf32>
    %121 = arith.mulf %120, %120 : vector<2x64xf32>
    %122 = arith.mulf %120, %121 : vector<2x64xf32>
    %cst_50 = arith.constant 4.471500e-02 : f32
    %123 = vector.broadcast %cst_50 : f32 to vector<2x64xf32>
    %124 = arith.mulf %123, %122 : vector<2x64xf32>
    %125 = arith.addf %120, %124 : vector<2x64xf32>
    %cst_51 = arith.constant 0.797884583 : f32
    %126 = vector.broadcast %cst_51 : f32 to vector<2x64xf32>
    %127 = arith.mulf %126, %125 : vector<2x64xf32>
    %128 = math.tanh %127 : vector<2x64xf32>
    %cst_52 = arith.constant 1.000000e+00 : f32
    %129 = vector.broadcast %cst_52 : f32 to vector<2x64xf32>
    %130 = arith.addf %129, %128 : vector<2x64xf32>
    %cst_53 = arith.constant 5.000000e-01 : f32
    %131 = vector.broadcast %cst_53 : f32 to vector<2x64xf32>
    %132 = arith.mulf %131, %130 : vector<2x64xf32>
    %133 = arith.mulf %120, %132 : vector<2x64xf32>
    %c480 = arith.constant 480 : index
    %c0_54 = arith.constant 0 : index
    %134 = vector.load %arg2[%c480, %c0_54] : memref<544x128xbf16, #tpu.memory_space<vmem>>, vector<64x32xbf16>
    %135 = arith.truncf %133 : vector<2x64xf32> to vector<2x64xbf16>
    %cst_55 = arith.constant dense<0.000000e+00> : vector<2x32xf32>
    %136 = tpu.matmul %135, %134, %cst_55 {dimension_numbers = #tpu.dot_dimension_numbers<[1], [0], [0], [1], [0, 0, 1, 1], [], []>} : vector<2x64xbf16>, vector<64x32xbf16>, vector<2x32xf32> -> vector<2x32xf32>
    %c104 = arith.constant 104 : index
    %c0_56 = arith.constant 0 : index
    %137 = vector.load %arg1[%c104, %c0_56] : memref<128x128xf32, #tpu.memory_space<vmem>>, vector<1x32xf32>
    %138 = vector.broadcast %137 : vector<1x32xf32> to vector<2x32xf32>
    %139 = arith.addf %136, %138 : vector<2x32xf32>
    %140 = arith.addf %114, %139 : vector<2x32xf32>
    %c112 = arith.constant 112 : index
    %c0_57 = arith.constant 0 : index
    %141 = vector.load %arg1[%c112, %c0_57] : memref<128x128xf32, #tpu.memory_space<vmem>>, vector<1x32xf32>
    %c120 = arith.constant 120 : index
    %c0_58 = arith.constant 0 : index
    %142 = vector.load %arg1[%c120, %c0_58] : memref<128x128xf32, #tpu.memory_space<vmem>>, vector<1x32xf32>
    %cst_59 = arith.constant dense<0.000000e+00> : vector<2xf32>
    %143 = vector.multi_reduction <add>, %140, %cst_59 [1] : vector<2x32xf32> to vector<2xf32>
    %144 = vector.shape_cast %143 : vector<2xf32> to vector<2x1xf32>
    %cst_60 = arith.constant 3.200000e+01 : f32
    %145 = vector.broadcast %cst_60 : f32 to vector<2x1xf32>
    %146 = arith.divf %144, %145 : vector<2x1xf32>
    %147 = vector.broadcast %146 : vector<2x1xf32> to vector<2x32xf32>
    %148 = arith.subf %140, %147 : vector<2x32xf32>
    %149 = arith.mulf %148, %148 : vector<2x32xf32>
    %cst_61 = arith.constant dense<0.000000e+00> : vector<2xf32>
    %150 = vector.multi_reduction <add>, %149, %cst_61 [1] : vector<2x32xf32> to vector<2xf32>
    %151 = vector.shape_cast %150 : vector<2xf32> to vector<2x1xf32>
    %cst_62 = arith.constant 3.200000e+01 : f32
    %152 = vector.broadcast %cst_62 : f32 to vector<2x1xf32>
    %153 = arith.divf %151, %152 : vector<2x1xf32>
    %154 = vector.broadcast %146 : vector<2x1xf32> to vector<2x32xf32>
    %155 = arith.subf %140, %154 : vector<2x32xf32>
    %cst_63 = arith.constant 9.99999996E-13 : f32
    %156 = vector.broadcast %cst_63 : f32 to vector<2x1xf32>
    %157 = arith.addf %153, %156 : vector<2x1xf32>
    %158 = math.rsqrt %157 : vector<2x1xf32>
    %159 = vector.broadcast %158 : vector<2x1xf32> to vector<2x32xf32>
    %160 = arith.mulf %155, %159 : vector<2x32xf32>
    %161 = vector.broadcast %141 : vector<1x32xf32> to vector<2x32xf32>
    %162 = arith.mulf %160, %161 : vector<2x32xf32>
    %163 = vector.broadcast %142 : vector<1x32xf32> to vector<2x32xf32>
    %164 = arith.addf %162, %163 : vector<2x32xf32>
    %c0_64 = arith.constant 0 : index
    %c0_65 = arith.constant 0 : index
    %165 = vector.load %arg3[%c0_64, %c0_65] : memref<2x32xf32, #tpu.memory_space<vmem>>, vector<2x32xf32>
    tpu.vector_store %arg3[%c0_64, %c0_65], %164 {strides = array<i32>} : memref<2x32xf32, #tpu.memory_space<vmem>>, vector<2x32xf32>,
    return
  }
}

</mosaic_0001>

<llo_original>
// kernel: text_feature_extractor_forward.1
$region0: #{text_feature_extractor_forward.1}
  #allocation0 [shape = 'u32[]', space=smem, size = 0x4, offset = 0x4, fixed_abs, tag = 'smem constant byte address 0x4 - core index']
  #allocation1 [shape = 'u32[144,128]{1,0:T(1,128)}', space=vmem, size = 0x12000, scoped, tag = 'internal scratch']
  %s0 = inlined_call_operand.vmem [shape: s32[16,1], index: 0, kind: input, shape index: {}]
  %s1 = inlined_call_operand.vmem [shape: f32[128,128], index: 1, kind: input, shape index: {}]
  %s2 = inlined_call_operand.vmem [shape: bf16[544,128], index: 2, kind: input, shape index: {}]
  %s3 = inlined_call_operand.hbm [shape: f32[2,32], index: 3, kind: output, shape index: {}]
  %s4 = sld [smem:[#allocation0]]
  $region22: #{text_feature_extractor_forward.1} parent=0
    _
  %s6 = ssub.s32 1, %s4
  %s7 = scalar_select 0, %s6, %s4
  $region1: #{text_feature_extractor_forward.1} parent=0
    #allocation2 [shape = 'u8[1024]{0}', space=vmem, size = 0x400, scoped, tag = 'output window, operand 0, single buffered']
    #allocation3 [shape = 's32[1]{0}', space=sflag, size = 0x4, scoped, tag = 'scoped memory for text_feature_extractor_forward.1']
    %8 = vsyncpa [#allocation3], 0
    // Predicated region
    $region2: #{text_feature_extractor_forward.1} parent=1 // pred_check
      _
    $region3: #{text_feature_extractor_forward.1} parent=1 // pred_check_branch
      %10 = sbr.rel (0) target = $region5
    $region4: #{text_feature_extractor_forward.1} parent=1 // pred_region
      _
    $region5: #{text_feature_extractor_forward.1} parent=1 // pred_fallthru
      _
    // Predicated region
    $region6: #{text_feature_extractor_forward.1} parent=1 // pred_check
      _
    $region7: #{text_feature_extractor_forward.1} parent=1 // pred_check_branch
      %12 = sbr.rel (0) target = $region9
    $region8: #{text_feature_extractor_forward.1} parent=1 // pred_region
      _
    $region9: #{text_feature_extractor_forward.1} parent=1 // pred_fallthru
      _
    // Predicated region
    $region10: #{text_feature_extractor_forward.1} parent=1 // pred_check
      _
    $region11: #{text_feature_extractor_forward.1} parent=1 // pred_check_branch
      %14 = sbr.rel (0) target = $region13
    $region12: #{text_feature_extractor_forward.1} parent=1 // pred_region
      _
    $region13: #{text_feature_extractor_forward.1} parent=1 // pred_fallthru
      _
    %v16 = vld [vmem:[%s0] sm:$0xff]
    %v17 = vld [vmem:[%s0 + $0x8] sm:$0xff]
    %v18 = vlaneseq
    %v19 = vand.u32 %v18, 127
    %20 = vset.pattern.permute.xlu0 0
    %21 = vperm.xlu0 %20, %v16
    %v22 = vpop.permute.xlu0 %21
    %23 = vset.pattern.permute.xlu0 0
    %24 = vperm.xlu0 %23, %v17
    %v25 = vpop.permute.xlu0 %24
    %vm26 = vcmp.eq.s32.totalorder %v19, %v22
    %vm27 = vcmp.eq.s32.totalorder %v19, %v25
    %v28 = vsel %vm26, 1, 0
    %v29 = vsel %vm27, 1, 0
    %v30 = vcvt.s32.f32 %v28
    %v31 = vcvt.s32.f32 %v29
    %v32 = vpack.c.bf16 %v31, %v30
    %v33 = vld [vmem:[%s2] sm:$0xf]
    %v34 = vld [vmem:[%s2 + $0x4] sm:$0xf]
    %v35 = vld [vmem:[%s2 + $0x8] sm:$0xf]
    %v36 = vld [vmem:[%s2 + $0xc] sm:$0xf]
    %v37 = vld [vmem:[%s2 + $0x10] sm:$0xf]
    %v38 = vld [vmem:[%s2 + $0x14] sm:$0xf]
    %v39 = vld [vmem:[%s2 + $0x18] sm:$0xf]
    %v40 = vld [vmem:[%s2 + $0x1c] sm:$0xf]
    %v41 = vld [vmem:[%s2 + $0x20] sm:$0xf]
    %v42 = vld [vmem:[%s2 + $0x24] sm:$0xf]
    %v43 = vld [vmem:[%s2 + $0x28] sm:$0xf]
    %v44 = vld [vmem:[%s2 + $0x2c] sm:$0xf]
    %v45 = vld [vmem:[%s2 + $0x30] sm:$0xf]
    %v46 = vld [vmem:[%s2 + $0x34] sm:$0xf]
    %v47 = vld [vmem:[%s2 + $0x38] sm:$0xf]
    %v48 = vld [vmem:[%s2 + $0x3c] sm:$0xf]
    %v49 = vld [vmem:[%s1] sm:$0xff]
    %v50 = vld [vmem:[%s1 + $0x8] sm:$0xff]
    %v67 = vunpack.c.l.b16 %v33
    %v68 = vunpack.c.l.b16 %v34
    %v69 = vunpack.c.l.b16 %v35
    %v70 = vunpack.c.l.b16 %v36
    %v71 = vunpack.c.l.b16 %v37
    %v72 = vunpack.c.l.b16 %v38
    %v73 = vunpack.c.l.b16 %v39
    %v74 = vunpack.c.l.b16 %v40
    %v75 = vunpack.c.l.b16 %v41
    %v76 = vunpack.c.l.b16 %v42
    %v77 = vunpack.c.l.b16 %v43
    %v78 = vunpack.c.l.b16 %v44
    %v79 = vunpack.c.l.b16 %v45
    %v80 = vunpack.c.l.b16 %v46
    %v81 = vunpack.c.l.b16 %v47
    %v82 = vunpack.c.l.b16 %v48
    %v83 = vpack.c.b16 %v68, %v67
    %v84 = vpack.c.b16 %v70, %v69
    %v85 = vpack.c.b16 %v72, %v71
    %v86 = vpack.c.b16 %v74, %v73
    %v87 = vpack.c.b16 %v76, %v75
    %v88 = vpack.c.b16 %v78, %v77
    %v89 = vpack.c.b16 %v80, %v79
    %v90 = vpack.c.b16 %v82, %v81
    %99 = vmatprep.subr.bf16.mxu0 0
    %100 = vmatpush1.bf16.msra.mxu0 %v90
    %101 = vmatprep.subr.bf16.mxu0 0
    %102 = vmatpush1.bf16.msra.mxu0 %v89
    %103 = vmatprep.subr.bf16.mxu0 0
    %104 = vmatpush1.bf16.msra.mxu0 %v88
    %105 = vmatprep.subr.bf16.mxu0 0
    %106 = vmatpush1.bf16.msra.mxu0 %v87
    %107 = vmatprep.subr.bf16.mxu0 0
    %108 = vmatpush1.bf16.msra.mxu0 %v86
    %109 = vmatprep.subr.bf16.mxu0 0
    %110 = vmatpush1.bf16.msra.mxu0 %v85
    %111 = vmatprep.subr.bf16.mxu0 0
    %112 = vmatpush1.bf16.msra.mxu0 %v84
    %113 = vmatprep.subr.bf16.mxu0 0
    %114 = vmatpush1.bf16.msra.mxu0 %v83
    %115 = vmatprep.subr.bf16.mxu0 0
    %116 = vmatpush2.bf16.msra.mxu0 0
    %117 = vmatprep.subr.bf16.mxu0 0
    %118 = vmatpush2.bf16.msra.mxu0 0
    %119 = vmatprep.subr.bf16.mxu0 0
    %120 = vmatpush2.bf16.msra.mxu0 0
    %121 = vmatprep.subr.bf16.mxu0 0
    %122 = vmatpush2.bf16.msra.mxu0 0
    %123 = vmatprep.subr.bf16.mxu0 0
    %124 = vmatpush2.bf16.msra.mxu0 0
    %125 = vmatprep.subr.bf16.mxu0 0
    %126 = vmatpush2.bf16.msra.mxu0 0
    %127 = vmatprep.subr.bf16.mxu0 0
    %128 = vmatpush2.bf16.msra.mxu0 0
    %129 = vmatprep.subr.bf16.mxu0 0
    %130 = vmatpush2.bf16.msra.mxu0 0
    %131 = vmatprep.mubr.bf16.mxu0 0
    %132 = vmatmul.mubr.bf16.gmra.mxu0 %v32
    %v133 = vpop.f32.mrf.mxu0
    %v134 = vadd.f32 %v49, %v133
    %v135 = vpop.f32.mrf.mxu0
    %v136 = vpop.f32.mrf.mxu0
    %v137 = vadd.f32 %v50, %v136
    %v138 = vpop.f32.mrf.mxu0
    %139 = vdwg.mxu0
    %v140 = vld [vmem:[%s1 + $0x20] sm:$0x1]
    %v141 = vld [vmem:[%s1 + $0x28] sm:$0x1]
    %vm142 = vcmask 261120
    %v143 = vsel %vm142, %v134, 0.0
    %144 = vadd.xlane.f32.xlu0 %v143
    %v145 = vpop.xlane.xlu0 %144
    %v146 = vsel %vm142, %v137, 0.0
    %147 = vadd.xlane.f32.xlu0 %v146
    %v148 = vpop.xlane.xlu0 %147
    %v149 = vrcp.pop 32.0
    %v150 = vmul.f32 %v145, %v149
    %v151 = vmul.f32 %v148, %v149
    %v152 = vsub.f32 %v134, %v150
    %v153 = vsub.f32 %v137, %v151
    %v154 = vmul.f32 %v152, %v152
    %v155 = vmul.f32 %v153, %v153
    %v156 = vsel %vm142, %v154, 0.0
    %157 = vadd.xlane.f32.xlu0 %v156
    %v158 = vpop.xlane.xlu0 %157
    %v159 = vsel %vm142, %v155, 0.0
    %160 = vadd.xlane.f32.xlu0 %v159
    %v161 = vpop.xlane.xlu0 %160
    %v162 = vmul.f32 %v158, %v149
    %v163 = vmul.f32 %v161, %v149
    %v164 = vadd.f32 %v162, 1e-12
    %v165 = vadd.f32 %v163, 1e-12
    %v166 = vrsqrt.pop %v164
    %v167 = vrsqrt.pop %v165
    %v168 = vmul.f32 %v152, %v166
    %v169 = vmul.f32 %v153, %v167
    %v170 = vlaneseq
    %v171 = vshrl.u32 %v170, 7
    %v172 = vsub.s32 0, %v171
    %v173 = vrot.slane %v140, %v172
    %v174 = vmul.f32 %v168, %v173
    %v175 = vmul.f32 %v169, %v173
    %v176 = vlaneseq
    %v177 = vshrl.u32 %v176, 7
    %v178 = vsub.s32 0, %v177
    %v179 = vrot.slane %v141, %v178
    %v180 = vadd.f32 %v174, %v179
    %v181 = vadd.f32 %v175, %v179
    %v182 = vpack.c.bf16 %v181, %v180
    %v184 = vrot.slane %v181, 7
    %vm186 = vcmask 1040384
    %v187 = vsel %vm186, %v180, %v184
    %v188 = vld [vmem:[%s2 + $0x50] sm:$0xf]
    %v189 = vld [vmem:[%s2 + $0x54] sm:$0xf]
    %v190 = vld [vmem:[%s2 + $0x58] sm:$0xf]
    %v191 = vld [vmem:[%s2 + $0x5c] sm:$0xf]
    %v192 = vpack.c.bf16 %v187, %v187
    %v193 = vld [vmem:[%s1 + $0x30] sm:$0x1]
    %v194 = vlaneseq
    %v195 = vshrl.u32 %v194, 7
    %v196 = vsub.s32 0, %v195
    %v197 = vrot.slane %v193, %v196
    %v202 = vunpack.c.l.b16 %v188
    %v203 = vunpack.c.l.b16 %v189
    %v204 = vunpack.c.l.b16 %v190
    %v205 = vunpack.c.l.b16 %v191
    %v206 = vpack.c.b16 %v203, %v202
    %v207 = vpack.c.b16 %v205, %v204
    %v211 = vsel %vm142, %v192, 0
    %213 = vmatprep.subr.bf16.mxu0 0
    %214 = vmatpush1.bf16.msra.mxu0 0
    %215 = vmatprep.subr.bf16.mxu0 0
    %216 = vmatpush1.bf16.msra.mxu0 0
    %217 = vmatprep.subr.bf16.mxu0 0
    %218 = vmatpush1.bf16.msra.mxu0 0
    %219 = vmatprep.subr.bf16.mxu0 0
    %220 = vmatpush1.bf16.msra.mxu0 0
    %221 = vmatprep.subr.bf16.mxu0 0
    %222 = vmatpush1.bf16.msra.mxu0 0
    %223 = vmatprep.subr.bf16.mxu0 0
    %224 = vmatpush1.bf16.msra.mxu0 0
    %225 = vmatprep.subr.bf16.mxu0 0
    %226 = vmatpush1.bf16.msra.mxu0 %v207
    %227 = vmatprep.subr.bf16.mxu0 0
    %228 = vmatpush1.bf16.msra.mxu0 %v206
    %229 = vmatprep.subr.bf16.mxu0 0
    %230 = vmatpush2.bf16.msra.mxu0 0
    %231 = vmatprep.subr.bf16.mxu0 0
    %232 = vmatpush2.bf16.msra.mxu0 0
    %233 = vmatprep.subr.bf16.mxu0 0
    %234 = vmatpush2.bf16.msra.mxu0 0
    %235 = vmatprep.subr.bf16.mxu0 0
    %236 = vmatpush2.bf16.msra.mxu0 0
    %237 = vmatprep.subr.bf16.mxu0 0
    %238 = vmatpush2.bf16.msra.mxu0 0
    %239 = vmatprep.subr.bf16.mxu0 0
    %240 = vmatpush2.bf16.msra.mxu0 0
    %241 = vmatprep.subr.bf16.mxu0 0
    %242 = vmatpush2.bf16.msra.mxu0 0
    %243 = vmatprep.subr.bf16.mxu0 0
    %244 = vmatpush2.bf16.msra.mxu0 0
    %245 = vmatprep.mubr.bf16.mxu0 0
    %246 = vmatmul.mubr.bf16.gmra.mxu0 %v211
    %v247 = vpop.f32.mrf.mxu0
    %v248 = vadd.f32 %v197, %v247
    %v249 = vpop.f32.mrf.mxu0
    %v250 = vpop.f32.mrf.mxu0
    %v251 = vpop.f32.mrf.mxu0
    %252 = vdwg.mxu0
    %v253 = vld [vmem:[%s2 + $0x60] sm:$0xf]
    %v254 = vld [vmem:[%s2 + $0x64] sm:$0xf]
    %v255 = vld [vmem:[%s2 + $0x68] sm:$0xf]
    %v256 = vld [vmem:[%s2 + $0x6c] sm:$0xf]
    %v257 = vld [vmem:[%s1 + $0x38] sm:$0x1]
    %v258 = vlaneseq
    %v259 = vshrl.u32 %v258, 7
    %v260 = vsub.s32 0, %v259
    %v261 = vrot.slane %v257, %v260
    %v266 = vunpack.c.l.b16 %v253
    %v267 = vunpack.c.l.b16 %v254
    %v268 = vunpack.c.l.b16 %v255
    %v269 = vunpack.c.l.b16 %v256
    %v270 = vpack.c.b16 %v267, %v266
    %v271 = vpack.c.b16 %v269, %v268
    %v275 = vsel %vm142, %v182, 0
    %277 = vmatprep.subr.bf16.mxu0 0
    %278 = vmatpush1.bf16.msra.mxu0 0
    %279 = vmatprep.subr.bf16.mxu0 0
    %280 = vmatpush1.bf16.msra.mxu0 0
    %281 = vmatprep.subr.bf16.mxu0 0
    %282 = vmatpush1.bf16.msra.mxu0 0
    %283 = vmatprep.subr.bf16.mxu0 0
    %284 = vmatpush1.bf16.msra.mxu0 0
    %285 = vmatprep.subr.bf16.mxu0 0
    %286 = vmatpush1.bf16.msra.mxu0 0
    %287 = vmatprep.subr.bf16.mxu0 0
    %288 = vmatpush1.bf16.msra.mxu0 0
    %289 = vmatprep.subr.bf16.mxu0 0
    %290 = vmatpush1.bf16.msra.mxu0 %v271
    %291 = vmatprep.subr.bf16.mxu0 0
    %292 = vmatpush1.bf16.msra.mxu0 %v270
    %293 = vmatprep.subr.bf16.mxu0 0
    %294 = vmatpush2.bf16.msra.mxu0 0
    %295 = vmatprep.subr.bf16.mxu0 0
    %296 = vmatpush2.bf16.msra.mxu0 0
    %297 = vmatprep.subr.bf16.mxu0 0
    %298 = vmatpush2.bf16.msra.mxu0 0
    %299 = vmatprep.subr.bf16.mxu0 0
    %300 = vmatpush2.bf16.msra.mxu0 0
    %301 = vmatprep.subr.bf16.mxu0 0
    %302 = vmatpush2.bf16.msra.mxu0 0
    %303 = vmatprep.subr.bf16.mxu0 0
    %304 = vmatpush2.bf16.msra.mxu0 0
    %305 = vmatprep.subr.bf16.mxu0 0
    %306 = vmatpush2.bf16.msra.mxu0 0
    %307 = vmatprep.subr.bf16.mxu0 0
    %308 = vmatpush2.bf16.msra.mxu0 0
    %309 = vmatprep.mubr.bf16.mxu0 0
    %310 = vmatmul.mubr.bf16.gmra.mxu0 %v275
    %v311 = vpop.f32.mrf.mxu0
    %v312 = vadd.f32 %v261, %v311
    %v313 = vpop.f32.mrf.mxu0
    %v314 = vpop.f32.mrf.mxu0
    %v315 = vadd.f32 %v261, %v314
    %v316 = vpop.f32.mrf.mxu0
    %317 = vdwg.mxu0
    %v318 = vld [vmem:[%s2 + $0x70] sm:$0xf]
    %v319 = vld [vmem:[%s2 + $0x74] sm:$0xf]
    %v320 = vld [vmem:[%s2 + $0x78] sm:$0xf]
    %v321 = vld [vmem:[%s2 + $0x7c] sm:$0xf]
    %v322 = vld [vmem:[%s1 + $0x40] sm:$0x1]
    %v323 = vlaneseq
    %v324 = vshrl.u32 %v323, 7
    %v325 = vsub.s32 0, %v324
    %v326 = vrot.slane %v322, %v325
    %v331 = vunpack.c.l.b16 %v318
    %v332 = vunpack.c.l.b16 %v319
    %v333 = vunpack.c.l.b16 %v320
    %v334 = vunpack.c.l.b16 %v321
    %v335 = vpack.c.b16 %v332, %v331
    %v336 = vpack.c.b16 %v334, %v333
    %339 = vmatprep.subr.bf16.mxu0 0
    %340 = vmatpush1.bf16.msra.mxu0 0
    %341 = vmatprep.subr.bf16.mxu0 0
    %342 = vmatpush1.bf16.msra.mxu0 0
    %343 = vmatprep.subr.bf16.mxu0 0
    %344 = vmatpush1.bf16.msra.mxu0 0
    %345 = vmatprep.subr.bf16.mxu0 0
    %346 = vmatpush1.bf16.msra.mxu0 0
    %347 = vmatprep.subr.bf16.mxu0 0
    %348 = vmatpush1.bf16.msra.mxu0 0
    %349 = vmatprep.subr.bf16.mxu0 0
    %350 = vmatpush1.bf16.msra.mxu0 0
    %351 = vmatprep.subr.bf16.mxu0 0
    %352 = vmatpush1.bf16.msra.mxu0 %v336
    %353 = vmatprep.subr.bf16.mxu0 0
    %354 = vmatpush1.bf16.msra.mxu0 %v335
    %355 = vmatprep.subr.bf16.mxu0 0
    %356 = vmatpush2.bf16.msra.mxu0 0
    %357 = vmatprep.subr.bf16.mxu0 0
    %358 = vmatpush2.bf16.msra.mxu0 0
    %359 = vmatprep.subr.bf16.mxu0 0
    %360 = vmatpush2.bf16.msra.mxu0 0
    %361 = vmatprep.subr.bf16.mxu0 0
    %362 = vmatpush2.bf16.msra.mxu0 0
    %363 = vmatprep.subr.bf16.mxu0 0
    %364 = vmatpush2.bf16.msra.mxu0 0
    %365 = vmatprep.subr.bf16.mxu0 0
    %366 = vmatpush2.bf16.msra.mxu0 0
    %367 = vmatprep.subr.bf16.mxu0 0
    %368 = vmatpush2.bf16.msra.mxu0 0
    %369 = vmatprep.subr.bf16.mxu0 0
    %370 = vmatpush2.bf16.msra.mxu0 0
    %371 = vmatprep.mubr.bf16.mxu0 0
    %372 = vmatmul.mubr.bf16.gmra.mxu0 %v275
    %v373 = vpop.f32.mrf.mxu0
    %v374 = vadd.f32 %v326, %v373
    %v375 = vpop.f32.mrf.mxu0
    %v376 = vpop.f32.mrf.mxu0
    %v377 = vadd.f32 %v326, %v376
    %v378 = vpop.f32.mrf.mxu0
    %379 = vdwg.mxu0
    %v380 = vld [vmem:[%s2 + $0x40] sm:$0xf]
    %v381 = vld [vmem:[%s2 + $0x44] sm:$0xf]
    %v382 = vpack.c.bf16 %v248, %v248
    %v385 = vunpack.c.l.b16 %v380
    %v386 = vunpack.c.l.b16 %v381
    %v387 = vpack.c.b16 %v386, %v385
    %vm388 = vcmask 15360
    %v390 = vsel %vm388, %v387, 0
    %v393 = vsel %vm186, %v382, 0
    %395 = vmatprep.subr.bf16.mxu0 0
    %396 = vmatpush1.bf16.msra.mxu0 0
    %397 = vmatprep.subr.bf16.mxu0 0
    %398 = vmatpush1.bf16.msra.mxu0 0
    %399 = vmatprep.subr.bf16.mxu0 0
    %400 = vmatpush1.bf16.msra.mxu0 0
    %401 = vmatprep.subr.bf16.mxu0 0
    %402 = vmatpush1.bf16.msra.mxu0 0
    %403 = vmatprep.subr.bf16.mxu0 0
    %404 = vmatpush1.bf16.msra.mxu0 0
    %405 = vmatprep.subr.bf16.mxu0 0
    %406 = vmatpush1.bf16.msra.mxu0 0
    %407 = vmatprep.subr.bf16.mxu0 0
    %408 = vmatpush1.bf16.msra.mxu0 0
    %409 = vmatprep.subr.bf16.mxu0 0
    %410 = vmatpush1.bf16.msra.mxu0 %v393
    %411 = vmatprep.subr.bf16.mxu0 0
    %412 = vmatpush2.bf16.msra.mxu0 0
    %413 = vmatprep.subr.bf16.mxu0 0
    %414 = vmatpush2.bf16.msra.mxu0 0
    %415 = vmatprep.subr.bf16.mxu0 0
    %416 = vmatpush2.bf16.msra.mxu0 0
    %417 = vmatprep.subr.bf16.mxu0 0
    %418 = vmatpush2.bf16.msra.mxu0 0
    %419 = vmatprep.subr.bf16.mxu0 0
    %420 = vmatpush2.bf16.msra.mxu0 0
    %421 = vmatprep.subr.bf16.mxu0 0
    %422 = vmatpush2.bf16.msra.mxu0 0
    %423 = vmatprep.subr.bf16.mxu0 0
    %424 = vmatpush2.bf16.msra.mxu0 0
    %425 = vmatprep.subr.bf16.mxu0 0
    %426 = vmatpush2.bf16.msra.mxu0 0
    %427 = vmatprep.mubr.bf16.mxu0 0
    %428 = vmatmul.mubr.bf16.gmra.mxu0 %v390
    %v429 = vpop.f32.mrf.mxu0
    %v430 = vadd.f32 0.0, %v429
    %v431 = vpop.f32.mrf.mxu0
    %v432 = vpop.f32.mrf.mxu0
    %v433 = vadd.f32 0.0, %v432
    %v434 = vpop.f32.mrf.mxu0
    %435 = vdwg.mxu0
    %v436 = vmul.f32 %v430, %v312
    %v437 = vmul.f32 %v433, %v315
    %v438 = vld [vmem:[%s2 + $0x80] sm:$0xf]
    %v439 = vld [vmem:[%s2 + $0x84] sm:$0xf]
    %v440 = vld [vmem:[%s2 + $0x88] sm:$0xf]
    %v441 = vld [vmem:[%s2 + $0x8c] sm:$0xf]
    %v442 = vpack.c.bf16 %v437, %v436
    %v443 = vld [vmem:[%s1 + $0x10] sm:$0xff]
    %v444 = vld [vmem:[%s1 + $0x18] sm:$0xff]
    %446 = vset.pattern.permute.xlu0 0
    %447 = vperm.xlu0 %446, %v443
    %v448 = vpop.permute.xlu0 %447
    %451 = vset.pattern.permute.xlu0 0
    %452 = vperm.xlu0 %451, %v444
    %v453 = vpop.permute.xlu0 %452
    %v459 = vunpack.c.l.b16 %v438
    %v460 = vunpack.c.l.b16 %v439
    %v461 = vunpack.c.l.b16 %v440
    %v462 = vunpack.c.l.b16 %v441
    %v463 = vpack.c.b16 %v460, %v459
    %v464 = vpack.c.b16 %v462, %v461
    %v468 = vsel %vm142, %v442, 0
    %470 = vmatprep.subr.bf16.mxu0 0
    %471 = vmatpush1.bf16.msra.mxu0 0
    %472 = vmatprep.subr.bf16.mxu0 0
    %473 = vmatpush1.bf16.msra.mxu0 0
    %474 = vmatprep.subr.bf16.mxu0 0
    %475 = vmatpush1.bf16.msra.mxu0 0
    %476 = vmatprep.subr.bf16.mxu0 0
    %477 = vmatpush1.bf16.msra.mxu0 0
    %478 = vmatprep.subr.bf16.mxu0 0
    %479 = vmatpush1.bf16.msra.mxu0 0
    %480 = vmatprep.subr.bf16.mxu0 0
    %481 = vmatpush1.bf16.msra.mxu0 0
    %482 = vmatprep.subr.bf16.mxu0 0
    %483 = vmatpush1.bf16.msra.mxu0 %v464
    %484 = vmatprep.subr.bf16.mxu0 0
    %485 = vmatpush1.bf16.msra.mxu0 %v463
    %486 = vmatprep.subr.bf16.mxu0 0
    %487 = vmatpush2.bf16.msra.mxu0 0
    %488 = vmatprep.subr.bf16.mxu0 0
    %489 = vmatpush2.bf16.msra.mxu0 0
    %490 = vmatprep.subr.bf16.mxu0 0
    %491 = vmatpush2.bf16.msra.mxu0 0
    %492 = vmatprep.subr.bf16.mxu0 0
    %493 = vmatpush2.bf16.msra.mxu0 0
    %494 = vmatprep.subr.bf16.mxu0 0
    %495 = vmatpush2.bf16.msra.mxu0 0
    %496 = vmatprep.subr.bf16.mxu0 0
    %497 = vmatpush2.bf16.msra.mxu0 0
    %498 = vmatprep.subr.bf16.mxu0 0
    %499 = vmatpush2.bf16.msra.mxu0 0
    %500 = vmatprep.subr.bf16.mxu0 0
    %501 = vmatpush2.bf16.msra.mxu0 0
    %502 = vmatprep.mubr.bf16.mxu0 0
    %503 = vmatmul.mubr.bf16.gmra.mxu0 %v468
    %v504 = vpop.f32.mrf.mxu0
    %v505 = vadd.f32 %v448, %v504
    %v506 = vpop.f32.mrf.mxu0
    %v507 = vpop.f32.mrf.mxu0
    %v508 = vadd.f32 %v453, %v507
    %v509 = vpop.f32.mrf.mxu0
    %510 = vdwg.mxu0
    %v511 = vmax.f32 %v505, %v508
    %v512 = vrot.slane %v511, 4
    %v513 = vmax.f32 %v511, %v512
    %v514 = vrot.slane %v513, 2
    %v515 = vmax.f32 %v513, %v514
    %v516 = vrot.slane %v515, 1
    %v517 = vmax.f32 %v515, %v516
    %v518 = vsub.f32 %v505, %v517
    %v519 = vsub.f32 %v508, %v517
    %v520 = vmul.f32 %v518, 1.442695
    %v521 = vpow.pop %v520
    %v522 = vmul.f32 %v519, 1.442695
    %v523 = vpow.pop %v522
    %v524 = vld [vmem:[%s2 + $0x48] sm:$0x1]
    %v525 = vpack.c.bf16 %v523, %v521
    %vm526 = vcmask 130048
    %v528 = vsel %vm526, %v524, 0
    %530 = vmatprep.subr.bf16.mxu0 0
    %531 = vmatpush1.bf16.msra.mxu0 0
    %532 = vmatprep.subr.bf16.mxu0 0
    %533 = vmatpush1.bf16.msra.mxu0 0
    %534 = vmatprep.subr.bf16.mxu0 0
    %535 = vmatpush1.bf16.msra.mxu0 0
    %536 = vmatprep.subr.bf16.mxu0 0
    %537 = vmatpush1.bf16.msra.mxu0 0
    %538 = vmatprep.subr.bf16.mxu0 0
    %539 = vmatpush1.bf16.msra.mxu0 0
    %540 = vmatprep.subr.bf16.mxu0 0
    %541 = vmatpush1.bf16.msra.mxu0 0
    %542 = vmatprep.subr.bf16.mxu0 0
    %543 = vmatpush1.bf16.msra.mxu0 0
    %544 = vmatprep.subr.bf16.mxu0 0
    %545 = vmatpush1.bf16.msra.mxu0 %v525
    %546 = vmatprep.subr.bf16.mxu0 0
    %547 = vmatpush2.bf16.msra.mxu0 0
    %548 = vmatprep.subr.bf16.mxu0 0
    %549 = vmatpush2.bf16.msra.mxu0 0
    %550 = vmatprep.subr.bf16.mxu0 0
    %551 = vmatpush2.bf16.msra.mxu0 0
    %552 = vmatprep.subr.bf16.mxu0 0
    %553 = vmatpush2.bf16.msra.mxu0 0
    %554 = vmatprep.subr.bf16.mxu0 0
    %555 = vmatpush2.bf16.msra.mxu0 0
    %556 = vmatprep.subr.bf16.mxu0 0
    %557 = vmatpush2.bf16.msra.mxu0 0
    %558 = vmatprep.subr.bf16.mxu0 0
    %559 = vmatpush2.bf16.msra.mxu0 0
    %560 = vmatprep.subr.bf16.mxu0 0
    %561 = vmatpush2.bf16.msra.mxu0 0
    %562 = vmatprep.mubr.bf16.mxu0 0
    %563 = vmatmul.mubr.bf16.gmra.mxu0 %v528
    %v564 = vpop.f32.mrf.mxu0
    %v565 = vadd.f32 0.0, %v564
    %v566 = vpop.f32.mrf.mxu0
    %v567 = vpop.f32.mrf.mxu0
    %v568 = vpop.f32.mrf.mxu0
    %569 = vdwg.mxu0
    %v570 = vpack.c.bf16 %v565, %v565
    %v572 = vsel %vm186, %v570, 0
    %574 = vmatprep.subr.bf16.mxu0 0
    %575 = vmatpush1.bf16.msra.mxu0 0
    %576 = vmatprep.subr.bf16.mxu0 0
    %577 = vmatpush1.bf16.msra.mxu0 0
    %578 = vmatprep.subr.bf16.mxu0 0
    %579 = vmatpush1.bf16.msra.mxu0 0
    %580 = vmatprep.subr.bf16.mxu0 0
    %581 = vmatpush1.bf16.msra.mxu0 0
    %582 = vmatprep.subr.bf16.mxu0 0
    %583 = vmatpush1.bf16.msra.mxu0 0
    %584 = vmatprep.subr.bf16.mxu0 0
    %585 = vmatpush1.bf16.msra.mxu0 0
    %586 = vmatprep.subr.bf16.mxu0 0
    %587 = vmatpush1.bf16.msra.mxu0 0
    %588 = vmatprep.subr.bf16.mxu0 0
    %589 = vmatpush1.bf16.msra.mxu0 %v572
    %590 = vmatprep.subr.bf16.mxu0 0
    %591 = vmatpush2.bf16.msra.mxu0 0
    %592 = vmatprep.subr.bf16.mxu0 0
    %593 = vmatpush2.bf16.msra.mxu0 0
    %594 = vmatprep.subr.bf16.mxu0 0
    %595 = vmatpush2.bf16.msra.mxu0 0
    %596 = vmatprep.subr.bf16.mxu0 0
    %597 = vmatpush2.bf16.msra.mxu0 0
    %598 = vmatprep.subr.bf16.mxu0 0
    %599 = vmatpush2.bf16.msra.mxu0 0
    %600 = vmatprep.subr.bf16.mxu0 0
    %601 = vmatpush2.bf16.msra.mxu0 0
    %602 = vmatprep.subr.bf16.mxu0 0
    %603 = vmatpush2.bf16.msra.mxu0 0
    %604 = vmatprep.subr.bf16.mxu0 0
    %605 = vmatpush2.bf16.msra.mxu0 0
    %606 = vmatprep.mubr.bf16.mxu0 0
    %607 = vmatmul.mubr.bf16.gmra.mxu0 %v390
    %v608 = vpop.f32.mrf.mxu0
    %v609 = vadd.f32 0.0, %v608
    %v610 = vpop.f32.mrf.mxu0
    %v611 = vpop.f32.mrf.mxu0
    %v612 = vadd.f32 0.0, %v611
    %v613 = vpop.f32.mrf.mxu0
    %614 = vdwg.mxu0
    %v615 = vrcp.pop %v609
    %v616 = vmul.f32 %v521, %v615
    %v617 = vrcp.pop %v612
    %v618 = vmul.f32 %v523, %v617
    %v619 = vld [vmem:[%s2 + $0x90] sm:$0xf]
    %v620 = vld [vmem:[%s2 + $0x94] sm:$0xf]
    %v621 = vld [vmem:[%s2 + $0x98] sm:$0xf]
    %v622 = vld [vmem:[%s2 + $0x9c] sm:$0xf]
    %v623 = vld [vmem:[%s2 + $0xa0] sm:$0xf]
    %v624 = vld [vmem:[%s2 + $0xa4] sm:$0xf]
    %v625 = vld [vmem:[%s2 + $0xa8] sm:$0xf]
    %v626 = vld [vmem:[%s2 + $0xac] sm:$0xf]
    %v627 = vld [vmem:[%s2 + $0xb0] sm:$0xf]
    %v628 = vld [vmem:[%s2 + $0xb4] sm:$0xf]
    %v629 = vld [vmem:[%s2 + $0xb8] sm:$0xf]
    %v630 = vld [vmem:[%s2 + $0xbc] sm:$0xf]
    %v631 = vld [vmem:[%s2 + $0xc0] sm:$0xf]
    %v632 = vld [vmem:[%s2 + $0xc4] sm:$0xf]
    %v633 = vld [vmem:[%s2 + $0xc8] sm:$0xf]
    %v634 = vld [vmem:[%s2 + $0xcc] sm:$0xf]
    %v635 = vpack.c.bf16 %v618, %v616
    %v652 = vunpack.c.l.b16 %v619
    %v653 = vunpack.c.l.b16 %v620
    %v654 = vunpack.c.l.b16 %v621
    %v655 = vunpack.c.l.b16 %v622
    %v656 = vunpack.c.l.b16 %v623
    %v657 = vunpack.c.l.b16 %v624
    %v658 = vunpack.c.l.b16 %v625
    %v659 = vunpack.c.l.b16 %v626
    %v660 = vunpack.c.l.b16 %v627
    %v661 = vunpack.c.l.b16 %v628
    %v662 = vunpack.c.l.b16 %v629
    %v663 = vunpack.c.l.b16 %v630
    %v664 = vunpack.c.l.b16 %v631
    %v665 = vunpack.c.l.b16 %v632
    %v666 = vunpack.c.l.b16 %v633
    %v667 = vunpack.c.l.b16 %v634
    %v668 = vpack.c.b16 %v653, %v652
    %v669 = vpack.c.b16 %v655, %v654
    %v670 = vpack.c.b16 %v657, %v656
    %v671 = vpack.c.b16 %v659, %v658
    %v672 = vpack.c.b16 %v661, %v660
    %v673 = vpack.c.b16 %v663, %v662
    %v674 = vpack.c.b16 %v665, %v664
    %v675 = vpack.c.b16 %v667, %v666
    %684 = vmatprep.subr.bf16.mxu0 0
    %685 = vmatpush1.bf16.msra.mxu0 %v675
    %686 = vmatprep.subr.bf16.mxu0 0
    %687 = vmatpush1.bf16.msra.mxu0 %v674
    %688 = vmatprep.subr.bf16.mxu0 0
    %689 = vmatpush1.bf16.msra.mxu0 %v673
    %690 = vmatprep.subr.bf16.mxu0 0
    %691 = vmatpush1.bf16.msra.mxu0 %v672
    %692 = vmatprep.subr.bf16.mxu0 0
    %693 = vmatpush1.bf16.msra.mxu0 %v671
    %694 = vmatprep.subr.bf16.mxu0 0
    %695 = vmatpush1.bf16.msra.mxu0 %v670
    %696 = vmatprep.subr.bf16.mxu0 0
    %697 = vmatpush1.bf16.msra.mxu0 %v669
    %698 = vmatprep.subr.bf16.mxu0 0
    %699 = vmatpush1.bf16.msra.mxu0 %v668
    %700 = vmatprep.subr.bf16.mxu0 0
    %701 = vmatpush2.bf16.msra.mxu0 0
    %702 = vmatprep.subr.bf16.mxu0 0
    %703 = vmatpush2.bf16.msra.mxu0 0
    %704 = vmatprep.subr.bf16.mxu0 0
    %705 = vmatpush2.bf16.msra.mxu0 0
    %706 = vmatprep.subr.bf16.mxu0 0
    %707 = vmatpush2.bf16.msra.mxu0 0
    %708 = vmatprep.subr.bf16.mxu0 0
    %709 = vmatpush2.bf16.msra.mxu0 0
    %710 = vmatprep.subr.bf16.mxu0 0
    %711 = vmatpush2.bf16.msra.mxu0 0
    %712 = vmatprep.subr.bf16.mxu0 0
    %713 = vmatpush2.bf16.msra.mxu0 0
    %714 = vmatprep.subr.bf16.mxu0 0
    %715 = vmatpush2.bf16.msra.mxu0 0
    %716 = vmatprep.mubr.bf16.mxu0 0
    %717 = vmatmul.mubr.bf16.gmra.mxu0 %v635
    %v718 = vpop.f32.mrf.mxu0
    %v719 = vadd.f32 0.0, %v718
    %v720 = vpop.f32.mrf.mxu0
    %v721 = vpop.f32.mrf.mxu0
    %v722 = vadd.f32 0.0, %v721
    %v723 = vpop.f32.mrf.mxu0
    %724 = vdwg.mxu0
    %v725 = vmul.f32 %v719, %v374
    %v726 = vmul.f32 %v722, %v377
    %v727 = vpack.c.bf16 %v726, %v725
    %728 = vmatprep.subr.bf16.mxu0 0
    %729 = vmatpush1.bf16.msra.mxu0 0
    %730 = vmatprep.subr.bf16.mxu0 0
    %731 = vmatpush1.bf16.msra.mxu0 0
    %732 = vmatprep.subr.bf16.mxu0 0
    %733 = vmatpush1.bf16.msra.mxu0 0
    %734 = vmatprep.subr.bf16.mxu0 0
    %735 = vmatpush1.bf16.msra.mxu0 0
    %736 = vmatprep.subr.bf16.mxu0 0
    %737 = vmatpush1.bf16.msra.mxu0 0
    %738 = vmatprep.subr.bf16.mxu0 0
    %739 = vmatpush1.bf16.msra.mxu0 0
    %740 = vmatprep.subr.bf16.mxu0 0
    %741 = vmatpush1.bf16.msra.mxu0 0
    %742 = vmatprep.subr.bf16.mxu0 0
    %743 = vmatpush1.bf16.msra.mxu0 %v727
    %744 = vmatprep.subr.bf16.mxu0 0
    %745 = vmatpush2.bf16.msra.mxu0 0
    %746 = vmatprep.subr.bf16.mxu0 0
    %747 = vmatpush2.bf16.msra.mxu0 0
    %748 = vmatprep.subr.bf16.mxu0 0
    %749 = vmatpush2.bf16.msra.mxu0 0
    %750 = vmatprep.subr.bf16.mxu0 0
    %751 = vmatpush2.bf16.msra.mxu0 0
    %752 = vmatprep.subr.bf16.mxu0 0
    %753 = vmatpush2.bf16.msra.mxu0 0
    %754 = vmatprep.subr.bf16.mxu0 0
    %755 = vmatpush2.bf16.msra.mxu0 0
    %756 = vmatprep.subr.bf16.mxu0 0
    %757 = vmatpush2.bf16.msra.mxu0 0
    %758 = vmatprep.subr.bf16.mxu0 0
    %759 = vmatpush2.bf16.msra.mxu0 0
    %760 = vmatprep.mubr.bf16.mxu0 0
    %761 = vmatmul.mubr.bf16.gmra.mxu0 %v528
    %v762 = vpop.f32.mrf.mxu0
    %v763 = vadd.f32 0.0, %v762
    %v764 = vpop.f32.mrf.mxu0
    %v765 = vpop.f32.mrf.mxu0
    %v766 = vpop.f32.mrf.mxu0
    %767 = vdwg.mxu0
    %v768 = vld [vmem:[%s2 + $0xd0] sm:$0xf]
    %v769 = vld [vmem:[%s2 + $0xd4] sm:$0xf]
    %v770 = vld [vmem:[%s2 + $0xd8] sm:$0xf]
    %v771 = vld [vmem:[%s2 + $0xdc] sm:$0xf]
    %v772 = vpack.c.bf16 %v763, %v763
    %v773 = vld [vmem:[%s1 + $0x48] sm:$0x1]
    %v774 = vlaneseq
    %v775 = vshrl.u32 %v774, 7
    %v776 = vsub.s32 0, %v775
    %v777 = vrot.slane %v773, %v776
    %v782 = vunpack.c.l.b16 %v768
    %v783 = vunpack.c.l.b16 %v769
    %v784 = vunpack.c.l.b16 %v770
    %v785 = vunpack.c.l.b16 %v771
    %v786 = vpack.c.b16 %v783, %v782
    %v787 = vpack.c.b16 %v785, %v784
    %v791 = vsel %vm142, %v772, 0
    %793 = vmatprep.subr.bf16.mxu0 0
    %794 = vmatpush1.bf16.msra.mxu0 0
    %795 = vmatprep.subr.bf16.mxu0 0
    %796 = vmatpush1.bf16.msra.mxu0 0
    %797 = vmatprep.subr.bf16.mxu0 0
    %798 = vmatpush1.bf16.msra.mxu0 0
    %799 = vmatprep.subr.bf16.mxu0 0
    %800 = vmatpush1.bf16.msra.mxu0 0
    %801 = vmatprep.subr.bf16.mxu0 0
    %802 = vmatpush1.bf16.msra.mxu0 0
    %803 = vmatprep.subr.bf16.mxu0 0
    %804 = vmatpush1.bf16.msra.mxu0 0
    %805 = vmatprep.subr.bf16.mxu0 0
    %806 = vmatpush1.bf16.msra.mxu0 %v787
    %807 = vmatprep.subr.bf16.mxu0 0
    %808 = vmatpush1.bf16.msra.mxu0 %v786
    %809 = vmatprep.subr.bf16.mxu0 0
    %810 = vmatpush2.bf16.msra.mxu0 0
    %811 = vmatprep.subr.bf16.mxu0 0
    %812 = vmatpush2.bf16.msra.mxu0 0
    %813 = vmatprep.subr.bf16.mxu0 0
    %814 = vmatpush2.bf16.msra.mxu0 0
    %815 = vmatprep.subr.bf16.mxu0 0
    %816 = vmatpush2.bf16.msra.mxu0 0
    %817 = vmatprep.subr.bf16.mxu0 0
    %818 = vmatpush2.bf16.msra.mxu0 0
    %819 = vmatprep.subr.bf16.mxu0 0
    %820 = vmatpush2.bf16.msra.mxu0 0
    %821 = vmatprep.subr.bf16.mxu0 0
    %822 = vmatpush2.bf16.msra.mxu0 0
    %823 = vmatprep.subr.bf16.mxu0 0
    %824 = vmatpush2.bf16.msra.mxu0 0
    %825 = vmatprep.mubr.bf16.mxu0 0
    %826 = vmatmul.mubr.bf16.gmra.mxu0 %v791
    %v827 = vpop.f32.mrf.mxu0
    %v828 = vadd.f32 %v777, %v827
    %v829 = vpop.f32.mrf.mxu0
    %v830 = vpop.f32.mrf.mxu0
    %v831 = vpop.f32.mrf.mxu0
    %832 = vdwg.mxu0
    %v833 = vadd.f32 %v187, %v828
    %v834 = vld [vmem:[%s1 + $0x50] sm:$0x1]
    %v835 = vld [vmem:[%s1 + $0x58] sm:$0x1]
    %vm836 = vcmask 254976
    %v837 = vsel %vm836, %v833, 0.0
    %838 = vadd.xlane.f32.xlu0 %v837
    %v839 = vpop.xlane.xlu0 %838
    %v840 = vmul.f32 %v839, %v149
    %v841 = vsub.f32 %v833, %v840
    %v842 = vmul.f32 %v841, %v841
    %v843 = vsel %vm836, %v842, 0.0
    %844 = vadd.xlane.f32.xlu0 %v843
    %v845 = vpop.xlane.xlu0 %844
    %v846 = vmul.f32 %v845, %v149
    %v847 = vadd.f32 %v846, 1e-12
    %v848 = vrsqrt.pop %v847
    %v849 = vmul.f32 %v841, %v848
    %v850 = vlaneseq
    %v851 = vshrl.u32 %v850, 7
    %v852 = vsub.s32 0, %v851
    %v853 = vrot.slane %v834, %v852
    %v854 = vmul.f32 %v849, %v853
    %v855 = vlaneseq
    %v856 = vshrl.u32 %v855, 7
    %v857 = vsub.s32 0, %v856
    %v858 = vrot.slane %v835, %v857
    %v859 = vadd.f32 %v854, %v858
    %v860 = vld [vmem:[%s2 + $0xe0] sm:$0xf]
    %v861 = vld [vmem:[%s2 + $0xe4] sm:$0xf]
    %v862 = vld [vmem:[%s2 + $0xe8] sm:$0xf]
    %v863 = vld [vmem:[%s2 + $0xec] sm:$0xf]
    %v864 = vpack.c.bf16 %v859, %v859
    %v865 = vld [vmem:[%s1 + $0x60] sm:$0x1]
    %v866 = vlaneseq
    %v867 = vshrl.u32 %v866, 7
    %v868 = vsub.s32 0, %v867
    %v869 = vrot.slane %v865, %v868
    %v874 = vunpack.c.l.b16 %v860
    %v875 = vunpack.c.l.b16 %v861
    %v876 = vunpack.c.l.b16 %v862
    %v877 = vunpack.c.l.b16 %v863
    %v878 = vpack.c.b16 %v875, %v874
    %v879 = vpack.c.b16 %v877, %v876
    %v883 = vsel %vm142, %v864, 0
    %885 = vmatprep.subr.bf16.mxu0 0
    %886 = vmatpush1.bf16.msra.mxu0 0
    %887 = vmatprep.subr.bf16.mxu0 0
    %888 = vmatpush1.bf16.msra.mxu0 0
    %889 = vmatprep.subr.bf16.mxu0 0
    %890 = vmatpush1.bf16.msra.mxu0 0
    %891 = vmatprep.subr.bf16.mxu0 0
    %892 = vmatpush1.bf16.msra.mxu0 0
    %893 = vmatprep.subr.bf16.mxu0 0
    %894 = vmatpush1.bf16.msra.mxu0 0
    %895 = vmatprep.subr.bf16.mxu0 0
    %896 = vmatpush1.bf16.msra.mxu0 0
    %897 = vmatprep.subr.bf16.mxu0 0
    %898 = vmatpush1.bf16.msra.mxu0 %v879
    %899 = vmatprep.subr.bf16.mxu0 0
    %900 = vmatpush1.bf16.msra.mxu0 %v878
    %901 = vmatprep.subr.bf16.mxu0 0
    %902 = vmatpush2.bf16.msra.mxu0 0
    %903 = vmatprep.subr.bf16.mxu0 0
    %904 = vmatpush2.bf16.msra.mxu0 0
    %905 = vmatprep.subr.bf16.mxu0 0
    %906 = vmatpush2.bf16.msra.mxu0 0
    %907 = vmatprep.subr.bf16.mxu0 0
    %908 = vmatpush2.bf16.msra.mxu0 0
    %909 = vmatprep.subr.bf16.mxu0 0
    %910 = vmatpush2.bf16.msra.mxu0 0
    %911 = vmatprep.subr.bf16.mxu0 0
    %912 = vmatpush2.bf16.msra.mxu0 0
    %913 = vmatprep.subr.bf16.mxu0 0
    %914 = vmatpush2.bf16.msra.mxu0 0
    %915 = vmatprep.subr.bf16.mxu0 0
    %916 = vmatpush2.bf16.msra.mxu0 0
    %917 = vmatprep.mubr.bf16.mxu0 0
    %918 = vmatmul.mubr.bf16.gmra.mxu0 %v883
    %v919 = vpop.f32.mrf.mxu0
    %v920 = vadd.f32 %v869, %v919
    %v921 = vpop.f32.mrf.mxu0
    %v922 = vpop.f32.mrf.mxu0
    %v923 = vpop.f32.mrf.mxu0
    %924 = vdwg.mxu0
    %v925 = vmul.f32 %v920, %v920
    %v926 = vmul.f32 %v920, %v925
    %v927 = vmul.f32 %v926, 0.044715
    %v928 = vadd.f32 %v920, %v927
    %v929 = vmul.f32 %v928, 0.7978846
    %v930 = vtanh.pop %v929
    %v931 = vadd.f32 %v930, 1.0
    %v932 = vmul.f32 %v931, 0.5
    %v933 = vmul.f32 %v920, %v932
    %v934 = vld [vmem:[%s2 + $0xf0] sm:$0xf]
    %v935 = vld [vmem:[%s2 + $0xf4] sm:$0xf]
    %v936 = vld [vmem:[%s2 + $0xf8] sm:$0xf]
    %v937 = vld [vmem:[%s2 + $0xfc] sm:$0xf]
    %v938 = vld [vmem:[%s2 + $0x100] sm:$0xf]
    %v939 = vld [vmem:[%s2 + $0x104] sm:$0xf]
    %v940 = vld [vmem:[%s2 + $0x108] sm:$0xf]
    %v941 = vld [vmem:[%s2 + $0x10c] sm:$0xf]
    %v942 = vpack.c.bf16 %v933, %v933
    %v943 = vld [vmem:[%s1 + $0x68] sm:$0x1]
    %v944 = vlaneseq
    %v945 = vshrl.u32 %v944, 7
    %v946 = vsub.s32 0, %v945
    %v947 = vrot.slane %v943, %v946
    %v956 = vunpack.c.l.b16 %v934
    %v957 = vunpack.c.l.b16 %v935
    %v958 = vunpack.c.l.b16 %v936
    %v959 = vunpack.c.l.b16 %v937
    %v960 = vunpack.c.l.b16 %v938
    %v961 = vunpack.c.l.b16 %v939
    %v962 = vunpack.c.l.b16 %v940
    %v963 = vunpack.c.l.b16 %v941
    %v964 = vpack.c.b16 %v957, %v956
    %v965 = vpack.c.b16 %v959, %v958
    %v966 = vpack.c.b16 %v961, %v960
    %v967 = vpack.c.b16 %v963, %v962
    %vm972 = vcmask 523264
    %v974 = vsel %vm972, %v942, 0
    %976 = vmatprep.subr.bf16.mxu0 0
    %977 = vmatpush1.bf16.msra.mxu0 0
    %978 = vmatprep.subr.bf16.mxu0 0
    %979 = vmatpush1.bf16.msra.mxu0 0
    %980 = vmatprep.subr.bf16.mxu0 0
    %981 = vmatpush1.bf16.msra.mxu0 0
    %982 = vmatprep.subr.bf16.mxu0 0
    %983 = vmatpush1.bf16.msra.mxu0 0
    %984 = vmatprep.subr.bf16.mxu0 0
    %985 = vmatpush1.bf16.msra.mxu0 %v967
    %986 = vmatprep.subr.bf16.mxu0 0
    %987 = vmatpush1.bf16.msra.mxu0 %v966
    %988 = vmatprep.subr.bf16.mxu0 0
    %989 = vmatpush1.bf16.msra.mxu0 %v965
    %990 = vmatprep.subr.bf16.mxu0 0
    %991 = vmatpush1.bf16.msra.mxu0 %v964
    %992 = vmatprep.subr.bf16.mxu0 0
    %993 = vmatpush2.bf16.msra.mxu0 0
    %994 = vmatprep.subr.bf16.mxu0 0
    %995 = vmatpush2.bf16.msra.mxu0 0
    %996 = vmatprep.subr.bf16.mxu0 0
    %997 = vmatpush2.bf16.msra.mxu0 0
    %998 = vmatprep.subr.bf16.mxu0 0
    %999 = vmatpush2.bf16.msra.mxu0 0
    %1000 = vmatprep.subr.bf16.mxu0 0
    %1001 = vmatpush2.bf16.msra.mxu0 0
    %1002 = vmatprep.subr.bf16.mxu0 0
    %1003 = vmatpush2.bf16.msra.mxu0 0
    %1004 = vmatprep.subr.bf16.mxu0 0
    %1005 = vmatpush2.bf16.msra.mxu0 0
    %1006 = vmatprep.subr.bf16.mxu0 0
    %1007 = vmatpush2.bf16.msra.mxu0 0
    %1008 = vmatprep.mubr.bf16.mxu0 0
    %1009 = vmatmul.mubr.bf16.gmra.mxu0 %v974
    %v1010 = vpop.f32.mrf.mxu0
    %v1011 = vadd.f32 %v947, %v1010
    %v1012 = vpop.f32.mrf.mxu0
    %v1013 = vpop.f32.mrf.mxu0
    %v1014 = vpop.f32.mrf.mxu0
    %1015 = vdwg.mxu0
    %v1016 = vadd.f32 %v859, %v1011
    %v1017 = vld [vmem:[%s1 + $0x70] sm:$0x1]
    %v1018 = vld [vmem:[%s1 + $0x78] sm:$0x1]
    %v1019 = vsel %vm836, %v1016, 0.0
    %1020 = vadd.xlane.f32.xlu0 %v1019
    %v1021 = vpop.xlane.xlu0 %1020
    %v1022 = vmul.f32 %v1021, %v149
    %v1023 = vsub.f32 %v1016, %v1022
    %v1024 = vmul.f32 %v1023, %v1023
    %v1025 = vsel %vm836, %v1024, 0.0
    %1026 = vadd.xlane.f32.xlu0 %v1025
    %v1027 = vpop.xlane.xlu0 %1026
    %v1028 = vmul.f32 %v1027, %v149
    %v1029 = vadd.f32 %v1028, 1e-12
    %v1030 = vrsqrt.pop %v1029
    %v1031 = vmul.f32 %v1023, %v1030
    %v1032 = vlaneseq
    %v1033 = vshrl.u32 %v1032, 7
    %v1034 = vsub.s32 0, %v1033
    %v1035 = vrot.slane %v1017, %v1034
    %v1036 = vmul.f32 %v1031, %v1035
    %v1037 = vlaneseq
    %v1038 = vshrl.u32 %v1037, 7
    %v1039 = vsub.s32 0, %v1038
    %v1040 = vrot.slane %v1018, %v1039
    %v1041 = vadd.f32 %v1036, %v1040
    %1042 = vst.msk [vmem:[#allocation2] sm:$0x3] %vm836, %v1041
    // Predicated region
    $region14: #{text_feature_extractor_forward.1} parent=1 // pred_check
      _
    $region15: #{text_feature_extractor_forward.1} parent=1 // pred_check_branch
      %1044 = sbr.rel (0) target = $region17
    $region16: #{text_feature_extractor_forward.1} parent=1 // pred_region
      %s1046 = ssub.s32 32, 32
      %1047 = vsyncadd [#allocation3], %s1046
      %s1049 = sshll.u32 [#allocation2], 4
      %s1050 = int_to_ptr.vmem [resolvable:$true] %s1049
      %1052 = dma.vmem_to_hbm [thread:$0]  %s1050, 32, %s3, [#allocation3]
    $region17: #{text_feature_extractor_forward.1} parent=1 // pred_fallthru
      _
    // Predicated region
    $region18: #{text_feature_extractor_forward.1} parent=1 // pred_check
      _
    $region19: #{text_feature_extractor_forward.1} parent=1 // pred_check_branch
      %1054 = sbr.rel (0) target = $region21
    $region20: #{text_feature_extractor_forward.1} parent=1 // pred_region
      %1055 = dma.done [#allocation3], 32
    $region21: #{text_feature_extractor_forward.1} parent=1 // pred_fallthru
      _
    %1056 = vsyncpa [#allocation3], 1

</llo_original>
